<compile_context>
chip_gen: v6e
topology: v6e:2x2x1
jax: 0.10.0
libtpu: 0.0.40
codegen_flags: <defaults>
</compile_context>

<pallas_src>
import jax
import jax.numpy as jnp
from jax.experimental import pallas as pl
from jax.experimental.pallas import tpu as pltpu


# ----------------------------------------------------------------------------
# Deterministic parameter construction (shapes from ExampleModel.__init__).
# Unused by the forward pass (identity), built only for completeness.
# ----------------------------------------------------------------------------
def build_params():
    key = jax.random.PRNGKey(0)
    ks = jax.random.split(key, 4)
    return {
        "param1": jnp.ones((1,), jnp.float32),
        # conv1: Conv2d(3, 4, kernel_size=1, bias=False) -> weight (4, 3, 1, 1)
        "conv1_w": jax.random.normal(ks[0], (4, 3, 1, 1), jnp.float32) * 0.1,
        # conv2: Conv2d(4, 2, kernel_size=1) -> weight (2, 4, 1, 1), bias (2,)
        "conv2_w": jax.random.normal(ks[1], (2, 4, 1, 1), jnp.float32) * 0.1,
        "conv2_b": jnp.zeros((2,), jnp.float32),
        # bn: BatchNorm2d(2)
        "bn_gamma": jnp.ones((2,), jnp.float32),
        "bn_beta": jnp.zeros((2,), jnp.float32),
        "bn_mean": jnp.zeros((2,), jnp.float32),
        "bn_var": jnp.ones((2,), jnp.float32),
        # sub.conv1: Conv2d(2, 2, kernel_size=1, groups=2) -> weight (2,1,1,1), bias (2,)
        "sub_conv1_w": jax.random.normal(ks[2], (2, 1, 1, 1), jnp.float32) * 0.1,
        "sub_conv1_b": jnp.zeros((2,), jnp.float32),
        # sub.gn: GroupNorm(2, 2)
        "sub_gn_gamma": jnp.ones((2,), jnp.float32),
        "sub_gn_beta": jnp.zeros((2,), jnp.float32),
        "sub_param1": jnp.ones((1,), jnp.float32),
    }


# ----------------------------------------------------------------------------
# Pallas identity-copy kernel (the forward pass hot path).
# ----------------------------------------------------------------------------
def _copy_kernel(x_ref, o_ref):
    o_ref[...] = x_ref[...]


_LANE = 128
_SMALL_BYTES = 512 * 1024              # below this: single whole-array block
_TARGET_BLOCK_BYTES = 2 * 1024 * 1024  # ~2 MiB block; double-buffered in+out
                                       # = ~8 MiB resident (fits v5e 16 MiB scoped VMEM)


def _whole_array_copy(x):
    """Tiny input: one block covering the full array, grid=(1,)."""
    ndim = x.ndim
    return pl.pallas_call(
        _copy_kernel,
        out_shape=jax.ShapeDtypeStruct(x.shape, x.dtype),
        grid=(1,),
        in_specs=[pl.BlockSpec(x.shape, lambda i: (0,) * ndim)],
        out_specs=pl.BlockSpec(x.shape, lambda i: (0,) * ndim),
    )(x)


def _tiled_slab_copy(slab, tile_rows):
    """Streamed copy of a 2-D slab, blocked along rows, full-width last dim."""
    rows, width = slab.shape
    grid = (pl.cdiv(rows, tile_rows),)
    return pl.pallas_call(
        _copy_kernel,
        out_shape=jax.ShapeDtypeStruct((rows, width), slab.dtype),
        grid_spec=pltpu.PrefetchScalarGridSpec(
            num_scalar_prefetch=0,
            grid=grid,
            in_specs=[pl.BlockSpec((tile_rows, width), lambda i: (i, 0))],
            out_specs=pl.BlockSpec((tile_rows, width), lambda i: (i, 0)),
        ),
        compiler_params=pltpu.CompilerParams(
            dimension_semantics=("parallel",)),  # v7x: both TCs take rows
    )(slab)


def pseudo_data_parallel_forward(x, params=None):
    """Identity forward of PseudoDataParallel, routed through a Pallas kernel.

    x: NCHW (or any-shaped) array.  Returns an array identical to x.
    """
    del params  # forward() never uses the module parameters
    n = x.size
    itemsize = jnp.dtype(x.dtype).itemsize
    nbytes = n * itemsize

    # Tiny inputs (the test case is 6 KiB): one DMA in, one vreg copy, one DMA
    # out.  No reshape, no pad, no grid steps beyond the single block.
    if nbytes <= _SMALL_BYTES:
        return _whole_array_copy(x)

    flat = x.reshape(-1)  # contiguous flatten: bitcast under jit, no HBM traffic

    if n % _LANE == 0:
        # Lane-dense slab: widest last dim (multiple of 128, capped) dividing n.
        width = _LANE
        for cand in (4096, 2048, 1024, 512, 256):
            if n % cand == 0:
                width = cand
                break
        rows = n // width
        # ~_TARGET_BLOCK_BYTES per block, row count a multiple of 8.
        tr = max(8, (_TARGET_BLOCK_BYTES // (width * itemsize)) // 8 * 8)
        tile_rows = min(rows, tr)
        out = _tiled_slab_copy(flat.reshape(rows, width), tile_rows)
        return out.reshape(x.shape)

    # Ragged total size (not a multiple of 128): tile a (leading, last-dim)
    # view with the full-width last dim; Pallas masks the partial final row
    # block, so there is still no wrapper-side pad/slice.
    # TODO(synk): for very large ragged inputs a masked-tail lane-dense kernel
    # (scalar-prefetched n + pl.when + masked pltpu.store) would be faster.
    last = x.shape[-1]
    lead = n // last
    tr = max(8, (_TARGET_BLOCK_BYTES // max(1, last * itemsize)) // 8 * 8)
    tile_rows = min(lead, tr)
    out = _tiled_slab_copy(flat.reshape(lead, last), tile_rows)
    return out.reshape(x.shape)


if __name__ == "__main__":
    key = jax.random.PRNGKey(0)
    k1, k2 = jax.random.split(key)

    params = build_params()
    fwd = jax.jit(pseudo_data_parallel_forward)

    # ExampleModel.conv1 implies 3 input channels; forward is identity so the
    # spatial dims are free — small NCHW input (hits the single-block path).
    x = jax.random.normal(k1, (2, 3, 16, 16), jnp.float32)
    y = jax.block_until_ready(fwd(x))
    assert y.shape == x.shape and y.dtype == x.dtype
    assert jnp.array_equal(y, x), "identity forward mismatch (small path)"

    # Also exercise the tiled lane-dense path (4 MiB -> width 4096, 2 grid steps).
    x_big = jax.random.normal(k2, (8, 4, 128, 256), jnp.float32)
    y_big = jax.block_until_ready(fwd(x_big))
    assert y_big.shape == x_big.shape and y_big.dtype == x_big.dtype
    assert jnp.array_equal(y_big, x_big), "identity forward mismatch (tiled path)"

    print("KERNEL_OK")
</pallas_src>

<mosaic_0001>
module attributes {stable_mosaic.version = 11 : i64} {
  func.func @_copy_kernel(%arg0: i32, %arg1: memref<2x3x16x16xf32, #tpu.memory_space<vmem>>, %arg2: memref<2x3x16x16xf32, #tpu.memory_space<vmem>>) attributes {dimension_semantics = [#tpu.dimension_semantics<arbitrary>], iteration_bounds = array<i64: 1>, scalar_prefetch = 0 : i64, scratch_operands = 0 : i64, tpu.core_type = #tpu.core_type<tc>, window_params = [{pipeline_mode = #tpu.pipeline_mode<synchronous>, transform_indices = @transform_0, window_bounds = array<i64: 2, 3, 16, 16>}, {pipeline_mode = #tpu.pipeline_mode<synchronous>, transform_indices = @transform_1, window_bounds = array<i64: 2, 3, 16, 16>}]} {
    %c0 = arith.constant 0 : index
    %c0_0 = arith.constant 0 : index
    %c0_1 = arith.constant 0 : index
    %c0_2 = arith.constant 0 : index
    %0 = vector.load %arg1[%c0, %c0_0, %c0_1, %c0_2] : memref<2x3x16x16xf32, #tpu.memory_space<vmem>>, vector<2x3x16x16xf32>
    %c0_3 = arith.constant 0 : index
    %c0_4 = arith.constant 0 : index
    %c0_5 = arith.constant 0 : index
    %c0_6 = arith.constant 0 : index
    %1 = vector.load %arg2[%c0_3, %c0_4, %c0_5, %c0_6] : memref<2x3x16x16xf32, #tpu.memory_space<vmem>>, vector<2x3x16x16xf32>
    tpu.vector_store %arg2[%c0_3, %c0_4, %c0_5, %c0_6], %0 {strides = array<i32>} : memref<2x3x16x16xf32, #tpu.memory_space<vmem>>, vector<2x3x16x16xf32>,
    return
  }
  func.func @transform_0(%arg0: i32) -> (i32, i32, i32, i32) {
    %c0_i32 = arith.constant 0 : i32
    %c0_i32_0 = arith.constant 0 : i32
    %c0_i32_1 = arith.constant 0 : i32
    %c0_i32_2 = arith.constant 0 : i32
    %c0_i32_3 = arith.constant 0 : i32
    return %c0_i32, %c0_i32_0, %c0_i32_1, %c0_i32_2 : i32, i32, i32, i32
  }
  func.func @transform_1(%arg0: i32) -> (i32, i32, i32, i32) {
    %c0_i32 = arith.constant 0 : i32
    %c0_i32_0 = arith.constant 0 : i32
    %c0_i32_1 = arith.constant 0 : i32
    %c0_i32_2 = arith.constant 0 : i32
    %c0_i32_3 = arith.constant 0 : i32
    return %c0_i32, %c0_i32_0, %c0_i32_1, %c0_i32_2 : i32, i32, i32, i32
  }
}

</mosaic_0001>

<llo_original>
// kernel: pseudo_data_parallel_forward.1
$region0: #{pseudo_data_parallel_forward.1}
  #allocation0 [shape = 'u32[]', space=smem, size = 0x4, offset = 0x4, fixed_abs, tag = 'smem constant byte address 0x4 - core index']
  #allocation1 [shape = 'u32[144,128]{1,0:T(1,128)}', space=vmem, size = 0x12000, scoped, tag = 'internal scratch']
  %s0 = inlined_call_operand.hbm [shape: f32[2,3,16,16], index: 0, kind: input, shape index: {}]
  %s1 = inlined_call_operand.hbm [shape: f32[2,3,16,16], index: 1, kind: output, shape index: {}]
  %s2 = sld [smem:[#allocation0]]
  $region18: #{pseudo_data_parallel_forward.1} parent=0
    _
  %s4 = ssub.s32 1, %s2
  %s5 = scalar_select 0, %s4, %s2
  $region1: #{pseudo_data_parallel_forward.1} parent=0
    #allocation2 [shape = 'u8[49152]{0}', space=vmem, size = 0xc000, scoped, tag = 'input window, operand 0, single buffered']
    #allocation3 [shape = 's32[1]{0}', space=sflag, size = 0x4, scoped, tag = 'scoped memory for pseudo_data_parallel_forward.1']
    #allocation4 [shape = 's32[1]{0}', space=sflag, size = 0x4, scoped, tag = 'scoped memory for pseudo_data_parallel_forward.1']
    #allocation5 [shape = 'u8[49152]{0}', space=vmem, size = 0xc000, scoped, tag = 'output window, operand 0, single buffered']
    %6 = vsyncpa [#allocation3], 0
    %7 = vsyncpa [#allocation4], 0
    // Predicated region
    $region2: #{pseudo_data_parallel_forward.1} parent=1 // pred_check
      _
    $region3: #{pseudo_data_parallel_forward.1} parent=1 // pred_check_branch
      %9 = sbr.rel (0) target = $region5
    $region4: #{pseudo_data_parallel_forward.1} parent=1 // pred_region
      %s11 = ssub.s32 1536, 1536
      %12 = vsyncadd [#allocation3], %s11
      %s13 = sshll.u32 [#allocation2], 4
      %s14 = int_to_ptr.vmem [resolvable:$true] %s13
      %19 = dma.hbm_to_vmem [thread:$0]  %s0, 1536, %s14, [#allocation3], 128, 128, 8
    $region5: #{pseudo_data_parallel_forward.1} parent=1 // pred_fallthru
      _
    // Predicated region
    $region6: #{pseudo_data_parallel_forward.1} parent=1 // pred_check
      _
    $region7: #{pseudo_data_parallel_forward.1} parent=1 // pred_check_branch
      %21 = sbr.rel (0) target = $region9
    $region8: #{pseudo_data_parallel_forward.1} parent=1 // pred_region
      %22 = dma.done [#allocation3], 1536
    $region9: #{pseudo_data_parallel_forward.1} parent=1 // pred_fallthru
      _
    %v23 = vld [vmem:[#allocation2] sm:$0xff]
    %v24 = vld [vmem:[#allocation2 + $0x8] sm:$0xff]
    %v25 = vld [vmem:[#allocation2 + $0x10] sm:$0xff]
    %v26 = vld [vmem:[#allocation2 + $0x18] sm:$0xff]
    %v27 = vld [vmem:[#allocation2 + $0x20] sm:$0xff]
    %v28 = vld [vmem:[#allocation2 + $0x28] sm:$0xff]
    %v29 = vld [vmem:[#allocation2 + $0x30] sm:$0xff]
    %v30 = vld [vmem:[#allocation2 + $0x38] sm:$0xff]
    %v31 = vld [vmem:[#allocation2 + $0x40] sm:$0xff]
    %v32 = vld [vmem:[#allocation2 + $0x48] sm:$0xff]
    %v33 = vld [vmem:[#allocation2 + $0x50] sm:$0xff]
    %v34 = vld [vmem:[#allocation2 + $0x58] sm:$0xff]
    %vm35 = vcmask 130048
    %36 = vst.msk [vmem:[#allocation5] sm:$0xff] %vm35, %v23
    %37 = vst.msk [vmem:[#allocation5 + $0x8] sm:$0xff] %vm35, %v24
    %38 = vst.msk [vmem:[#allocation5 + $0x10] sm:$0xff] %vm35, %v25
    %39 = vst.msk [vmem:[#allocation5 + $0x18] sm:$0xff] %vm35, %v26
    %40 = vst.msk [vmem:[#allocation5 + $0x20] sm:$0xff] %vm35, %v27
    %41 = vst.msk [vmem:[#allocation5 + $0x28] sm:$0xff] %vm35, %v28
    %42 = vst.msk [vmem:[#allocation5 + $0x30] sm:$0xff] %vm35, %v29
    %43 = vst.msk [vmem:[#allocation5 + $0x38] sm:$0xff] %vm35, %v30
    %44 = vst.msk [vmem:[#allocation5 + $0x40] sm:$0xff] %vm35, %v31
    %45 = vst.msk [vmem:[#allocation5 + $0x48] sm:$0xff] %vm35, %v32
    %46 = vst.msk [vmem:[#allocation5 + $0x50] sm:$0xff] %vm35, %v33
    %47 = vst.msk [vmem:[#allocation5 + $0x58] sm:$0xff] %vm35, %v34
    // Predicated region
    $region10: #{pseudo_data_parallel_forward.1} parent=1 // pred_check
      _
    $region11: #{pseudo_data_parallel_forward.1} parent=1 // pred_check_branch
      %49 = sbr.rel (0) target = $region13
    $region12: #{pseudo_data_parallel_forward.1} parent=1 // pred_region
      %s51 = ssub.s32 1536, 1536
      %52 = vsyncadd [#allocation4], %s51
      %s53 = sshll.u32 [#allocation5], 4
      %s54 = int_to_ptr.vmem [resolvable:$true] %s53
      %59 = dma.vmem_to_hbm [thread:$0]  %s54, 1536, %s1, [#allocation4], 128, 128, 8
    $region13: #{pseudo_data_parallel_forward.1} parent=1 // pred_fallthru
      _
    // Predicated region
    $region14: #{pseudo_data_parallel_forward.1} parent=1 // pred_check
      _
    $region15: #{pseudo_data_parallel_forward.1} parent=1 // pred_check_branch
      %61 = sbr.rel (0) target = $region17
    $region16: #{pseudo_data_parallel_forward.1} parent=1 // pred_region
      %62 = dma.done [#allocation4], 1536
    $region17: #{pseudo_data_parallel_forward.1} parent=1 // pred_fallthru
      _
    %63 = vsyncpa [#allocation3], 1
    %64 = vsyncpa [#allocation4], 1

</llo_original>
